<compile_context>
chip_gen: v7x
topology: tpu7x:2x2x1
jax: 0.10.0
libtpu: 0.0.40
codegen_flags: <defaults>
</compile_context>

<pallas_src>
import jax
import jax.numpy as jnp
from jax.experimental import pallas as pl
from jax.experimental.pallas import tpu as pltpu


def _round_up(n: int, m: int) -> int:
    return ((n + m - 1) // m) * m


def iris_mlp_kernel(xT_ref, w1_ref, b1_ref, w2_ref, b2_ref, oT_ref):
    # Hidden layer: [6, 4] @ [4, TB] + [6, 1]  -> [6, TB]
    h = jnp.dot(w1_ref[...], xT_ref[...], preferred_element_type=jnp.float32)
    h = jax.nn.sigmoid(h + b1_ref[...])
    # Output layer: [3, 6] @ [6, TB] + [3, 1]  -> [3, TB]
    y = jnp.dot(w2_ref[...], h, preferred_element_type=jnp.float32)
    oT_ref[...] = (y + b2_ref[...]).astype(oT_ref.dtype)


def iris_forward(x, w1, b1, w2, b2, *, block_b: int = 1024):
    """Forward pass of IrisModel.

    x : [B, 4] float32
    w1: [6, 4], b1: [6]   (torch nn.Linear layout)
    w2: [3, 6], b2: [3]
    returns [B, 3] float32
    """
    B, f_in = x.shape
    f_hid, _ = w1.shape
    f_out, _ = w2.shape

    # Batch tile: multiple of 128 lanes, capped at block_b (well under the
    # 32 MiB default scoped VMEM even on v7x: a (4, 1024) f32 tile is 16 KiB).
    TB = min(block_b, _round_up(B, 128))
    B_pad = _round_up(B, TB)

    # Feature-major layout: x^T is [4, B_pad]; batch lives on the lane axis.
    xT = x.T
    if B_pad != B:
        xT = jnp.pad(xT, ((0, 0), (0, B_pad - B)))

    b1c = b1.reshape(f_hid, 1)
    b2c = b2.reshape(f_out, 1)

    grid = (B_pad // TB,)

    oT = pl.pallas_call(
        iris_mlp_kernel,
        out_shape=jax.ShapeDtypeStruct((f_out, B_pad), jnp.float32),
        grid=grid,
        in_specs=[
            # Batch-tiled, lane-dense input.
            pl.BlockSpec((f_in, TB), lambda i: (0, i)),
            # Tiny weights/biases: constant block index -> stay VMEM-resident.
            pl.BlockSpec((f_hid, f_in), lambda i: (0, 0)),
            pl.BlockSpec((f_hid, 1), lambda i: (0, 0)),
            pl.BlockSpec((f_out, f_hid), lambda i: (0, 0)),
            pl.BlockSpec((f_out, 1), lambda i: (0, 0)),
        ],
        out_specs=pl.BlockSpec((f_out, TB), lambda i: (0, i)),
        compiler_params=pltpu.CompilerParams(
            dimension_semantics=("parallel",),
        ),
    )(xT, w1, b1c, w2, b2c)

    # Back to the user-facing [B, 3] layout.
    return oT[:, :B].T


def init_params(key):
    """Deterministic init mirroring torch.nn.Linear defaults.

    torch layout: W [out, in], b [out]; uniform(-1/sqrt(fan_in), 1/sqrt(fan_in)).
    """
    k1, k2, k3, k4 = jax.random.split(key, 4)
    bound1 = 1.0 / jnp.sqrt(4.0)
    bound2 = 1.0 / jnp.sqrt(6.0)
    w1 = jax.random.uniform(k1, (6, 4), jnp.float32, -bound1, bound1)
    b1 = jax.random.uniform(k2, (6,), jnp.float32, -bound1, bound1)
    w2 = jax.random.uniform(k3, (3, 6), jnp.float32, -bound2, bound2)
    b2 = jax.random.uniform(k4, (3,), jnp.float32, -bound2, bound2)
    return w1, b1, w2, b2


if __name__ == "__main__":
    key = jax.random.PRNGKey(0)
    k_params, k_x = jax.random.split(key)

    w1, b1, w2, b2 = init_params(k_params)
    # Iris features: 4 per sample; small batch of 8.
    x = jax.random.normal(k_x, (8, 4), jnp.float32)

    out = iris_forward(x, w1, b1, w2, b2)
    out = jax.block_until_ready(out)

    # Reference check in plain JAX (torch-layout math).
    ref = jax.nn.sigmoid(x @ w1.T + b1) @ w2.T + b2
    assert out.shape == (8, 3)
    assert jnp.allclose(out, ref, atol=1e-5, rtol=1e-5)

    print("KERNEL_OK")
</pallas_src>

<mosaic_0001>
module attributes {stable_mosaic.version = 11 : i64} {
  func.func @iris_mlp_kernel(%arg0: i32, %arg1: memref<4x128xf32, #tpu.memory_space<vmem>>, %arg2: memref<6x4xf32, #tpu.memory_space<vmem>>, %arg3: memref<6x1xf32, #tpu.memory_space<vmem>>, %arg4: memref<3x6xf32, #tpu.memory_space<vmem>>, %arg5: memref<3x1xf32, #tpu.memory_space<vmem>>, %arg6: memref<3x128xf32, #tpu.memory_space<vmem>>) attributes {dimension_semantics = [#tpu.dimension_semantics<parallel>], iteration_bounds = array<i64: 1>, scalar_prefetch = 0 : i64, scratch_operands = 0 : i64, tpu.core_type = #tpu.core_type<tc>, window_params = [{transform_indices = @transform_0, window_bounds = array<i64: 4, 128>}, {pipeline_mode = #tpu.pipeline_mode<synchronous>, transform_indices = @transform_1, window_bounds = array<i64: 6, 4>}, {pipeline_mode = #tpu.pipeline_mode<synchronous>, transform_indices = @transform_2, window_bounds = array<i64: 6, 1>}, {pipeline_mode = #tpu.pipeline_mode<synchronous>, transform_indices = @transform_3, window_bounds = array<i64: 3, 6>}, {pipeline_mode = #tpu.pipeline_mode<synchronous>, transform_indices = @transform_4, window_bounds = array<i64: 3, 1>}, {transform_indices = @transform_5, window_bounds = array<i64: 3, 128>}]} {
    %c0 = arith.constant 0 : index
    %c0_0 = arith.constant 0 : index
    %0 = vector.load %arg2[%c0, %c0_0] : memref<6x4xf32, #tpu.memory_space<vmem>>, vector<6x4xf32>
    %c0_1 = arith.constant 0 : index
    %c0_2 = arith.constant 0 : index
    %1 = vector.load %arg1[%c0_1, %c0_2] : memref<4x128xf32, #tpu.memory_space<vmem>>, vector<4x128xf32>
    %cst = arith.constant dense<0.000000e+00> : vector<6x128xf32>
    %2 = tpu.matmul %0, %1, %cst {dimension_numbers = #tpu.dot_dimension_numbers<[1], [0], [0], [1], [0, 0, 1, 1], [], []>} : vector<6x4xf32>, vector<4x128xf32>, vector<6x128xf32> -> vector<6x128xf32>
    %c0_3 = arith.constant 0 : index
    %c0_4 = arith.constant 0 : index
    %3 = vector.load %arg3[%c0_3, %c0_4] : memref<6x1xf32, #tpu.memory_space<vmem>>, vector<6x1xf32>
    %4 = vector.broadcast %3 : vector<6x1xf32> to vector<6x128xf32>
    %5 = arith.addf %2, %4 : vector<6x128xf32>
    %6 = arith.negf %5 : vector<6x128xf32>
    %7 = math.exp %6 : vector<6x128xf32>
    %cst_5 = arith.constant 1.000000e+00 : f32
    %8 = vector.broadcast %cst_5 : f32 to vector<6x128xf32>
    %9 = arith.addf %8, %7 : vector<6x128xf32>
    %10 = arith.divf %8, %9 : vector<6x128xf32>
    %c0_6 = arith.constant 0 : index
    %c0_7 = arith.constant 0 : index
    %11 = vector.load %arg4[%c0_6, %c0_7] : memref<3x6xf32, #tpu.memory_space<vmem>>, vector<3x6xf32>
    %cst_8 = arith.constant dense<0.000000e+00> : vector<3x128xf32>
    %12 = tpu.matmul %11, %10, %cst_8 {dimension_numbers = #tpu.dot_dimension_numbers<[1], [0], [0], [1], [0, 0, 1, 1], [], []>} : vector<3x6xf32>, vector<6x128xf32>, vector<3x128xf32> -> vector<3x128xf32>
    %c0_9 = arith.constant 0 : index
    %c0_10 = arith.constant 0 : index
    %13 = vector.load %arg5[%c0_9, %c0_10] : memref<3x1xf32, #tpu.memory_space<vmem>>, vector<3x1xf32>
    %14 = vector.broadcast %13 : vector<3x1xf32> to vector<3x128xf32>
    %15 = arith.addf %12, %14 : vector<3x128xf32>
    %c0_11 = arith.constant 0 : index
    %c0_12 = arith.constant 0 : index
    %16 = vector.load %arg6[%c0_11, %c0_12] : memref<3x128xf32, #tpu.memory_space<vmem>>, vector<3x128xf32>
    tpu.vector_store %arg6[%c0_11, %c0_12], %15 {strides = array<i32>} : memref<3x128xf32, #tpu.memory_space<vmem>>, vector<3x128xf32>,
    return
  }
  func.func @transform_0(%arg0: i32) -> (i32, i32) {
    %c0_i32 = arith.constant 0 : i32
    %c0_i32_0 = arith.constant 0 : i32
    return %c0_i32, %arg0 : i32, i32
  }
  func.func @transform_1(%arg0: i32) -> (i32, i32) {
    %c0_i32 = arith.constant 0 : i32
    %c0_i32_0 = arith.constant 0 : i32
    %c0_i32_1 = arith.constant 0 : i32
    return %c0_i32, %c0_i32_0 : i32, i32
  }
  func.func @transform_2(%arg0: i32) -> (i32, i32) {
    %c0_i32 = arith.constant 0 : i32
    %c0_i32_0 = arith.constant 0 : i32
    %c0_i32_1 = arith.constant 0 : i32
    return %c0_i32, %c0_i32_0 : i32, i32
  }
  func.func @transform_3(%arg0: i32) -> (i32, i32) {
    %c0_i32 = arith.constant 0 : i32
    %c0_i32_0 = arith.constant 0 : i32
    %c0_i32_1 = arith.constant 0 : i32
    return %c0_i32, %c0_i32_0 : i32, i32
  }
  func.func @transform_4(%arg0: i32) -> (i32, i32) {
    %c0_i32 = arith.constant 0 : i32
    %c0_i32_0 = arith.constant 0 : i32
    %c0_i32_1 = arith.constant 0 : i32
    return %c0_i32, %c0_i32_0 : i32, i32
  }
  func.func @transform_5(%arg0: i32) -> (i32, i32) {
    %c0_i32 = arith.constant 0 : i32
    %c0_i32_0 = arith.constant 0 : i32
    return %c0_i32, %arg0 : i32, i32
  }
}

</mosaic_0001>

<llo_original>
// kernel: tpu_custom_call.1
$region0: #{tpu_custom_call.1}
  #allocation0 [shape = 'u32[]', space=smem, size = 0x4, offset = 0x4, fixed_abs, tag = 'smem constant byte address 0x4 - core index']
  #allocation1 [shape = 'u32[144,128]{1,0:T(1,128)}', space=vmem, size = 0x12000, scoped, tag = 'internal scratch']
  %s0 = inlined_call_operand.vmem [shape: f32[4,128], index: 0, kind: input, shape index: {}]
  %s1 = inlined_call_operand.vmem [shape: f32[6,4], index: 1, kind: input, shape index: {}]
  %s2 = inlined_call_operand.vmem [shape: f32[6,1], index: 2, kind: input, shape index: {}]
  %s3 = inlined_call_operand.vmem [shape: f32[3,6], index: 3, kind: input, shape index: {}]
  %s4 = inlined_call_operand.vmem [shape: f32[3,1], index: 4, kind: input, shape index: {}]
  %s5 = inlined_call_operand.hbm [shape: f32[3,128], index: 5, kind: output, shape index: {}]
  %s6 = sld [smem:[#allocation0]]
  $region30: #{tpu_custom_call.1} parent=0
    _
  %s8 = ssub.s32 1, %s6
  %s9 = scalar_select 0, %s8, %s6
  $region1: #{tpu_custom_call.1} parent=0
    #allocation2 [shape = 'u8[2048]{0}', space=vmem, size = 0x800, scoped, tag = 'output window, operand 0, single buffered']
    #allocation3 [shape = 's32[1]{0}', space=sflag, size = 0x4, scoped, tag = 'scoped memory for tpu_custom_call.1']
    %10 = vsyncpa [#allocation3], 0
    // Predicated region
    $region2: #{tpu_custom_call.1} parent=1 // pred_check
      _
    $region3: #{tpu_custom_call.1} parent=1 // pred_check_branch
      %12 = sbr.rel (0) target = $region5
    $region4: #{tpu_custom_call.1} parent=1 // pred_region
      _
    $region5: #{tpu_custom_call.1} parent=1 // pred_fallthru
      _
    // Predicated region
    $region6: #{tpu_custom_call.1} parent=1 // pred_check
      _
    $region7: #{tpu_custom_call.1} parent=1 // pred_check_branch
      %14 = sbr.rel (0) target = $region9
    $region8: #{tpu_custom_call.1} parent=1 // pred_region
      _
    $region9: #{tpu_custom_call.1} parent=1 // pred_fallthru
      _
    // Predicated region
    $region10: #{tpu_custom_call.1} parent=1 // pred_check
      _
    $region11: #{tpu_custom_call.1} parent=1 // pred_check_branch
      %16 = sbr.rel (0) target = $region13
    $region12: #{tpu_custom_call.1} parent=1 // pred_region
      _
    $region13: #{tpu_custom_call.1} parent=1 // pred_fallthru
      _
    // Predicated region
    $region14: #{tpu_custom_call.1} parent=1 // pred_check
      _
    $region15: #{tpu_custom_call.1} parent=1 // pred_check_branch
      %18 = sbr.rel (0) target = $region17
    $region16: #{tpu_custom_call.1} parent=1 // pred_region
      _
    $region17: #{tpu_custom_call.1} parent=1 // pred_fallthru
      _
    // Predicated region
    $region18: #{tpu_custom_call.1} parent=1 // pred_check
      _
    $region19: #{tpu_custom_call.1} parent=1 // pred_check_branch
      %20 = sbr.rel (0) target = $region21
    $region20: #{tpu_custom_call.1} parent=1 // pred_region
      _
    $region21: #{tpu_custom_call.1} parent=1 // pred_fallthru
      _
    %v21 = vld [vmem:[%s1] sm:$0x3f]
    %v22 = vld [vmem:[%s0] sm:$0xf]
    %v23 = vld [vmem:[%s2] sm:$0x3f]
    %25 = vset.pattern.permute.xlu0 0
    %26 = vperm.xlu0 %25, %v23
    %v27 = vpop.permute.xlu0 %26
    %vm29 = vcmask 31744
    %v31 = vsel %vm29, %v21, 0
    %vm33 = vcmask 1043456
    %v35 = vsel %vm33, %v22, 0
    %37 = vmatprep.subr.mxu0 0.0
    %38 = vmatpush1.msra.mxu0 %v35
    %39 = vmatprep.subr.mxu0 0.0
    %40 = vmatpush1.msra.mxu0 0.0
    %41 = vmatprep.subr.mxu0 0.0
    %42 = vmatpush1.msra.mxu0 0.0
    %43 = vmatprep.subr.mxu0 0.0
    %44 = vmatpush1.msra.mxu0 0.0
    %45 = vmatprep.subr.mxu0 0.0
    %46 = vmatpush1.msra.mxu0 0.0
    %47 = vmatprep.subr.mxu0 0.0
    %48 = vmatpush1.msra.mxu0 0.0
    %49 = vmatprep.subr.mxu0 0.0
    %50 = vmatpush1.msra.mxu0 0.0
    %51 = vmatprep.subr.mxu0 0.0
    %52 = vmatpush1.msra.mxu0 0.0
    %53 = vmatprep.subr.mxu0 0.0
    %54 = vmatpush1.msra.mxu0 0.0
    %55 = vmatprep.subr.mxu0 0.0
    %56 = vmatpush1.msra.mxu0 0.0
    %57 = vmatprep.subr.mxu0 0.0
    %58 = vmatpush1.msra.mxu0 0.0
    %59 = vmatprep.subr.mxu0 0.0
    %60 = vmatpush1.msra.mxu0 0.0
    %61 = vmatprep.subr.mxu0 0.0
    %62 = vmatpush1.msra.mxu0 0.0
    %63 = vmatprep.subr.mxu0 0.0
    %64 = vmatpush1.msra.mxu0 0.0
    %65 = vmatprep.subr.mxu0 0.0
    %66 = vmatpush1.msra.mxu0 0.0
    %67 = vmatprep.subr.mxu0 0.0
    %68 = vmatpush1.msra.mxu0 0.0
    %69 = vmatprep.subr.mxu0 0.0
    %70 = vmatpush1.msra.mxu0 0.0
    %71 = vmatprep.subr.mxu0 0.0
    %72 = vmatpush1.msra.mxu0 0.0
    %73 = vmatprep.subr.mxu0 0.0
    %74 = vmatpush1.msra.mxu0 0.0
    %75 = vmatprep.subr.mxu0 0.0
    %76 = vmatpush1.msra.mxu0 0.0
    %77 = vmatprep.subr.mxu0 0.0
    %78 = vmatpush1.msra.mxu0 0.0
    %79 = vmatprep.subr.mxu0 0.0
    %80 = vmatpush1.msra.mxu0 0.0
    %81 = vmatprep.subr.mxu0 0.0
    %82 = vmatpush1.msra.mxu0 0.0
    %83 = vmatprep.subr.mxu0 0.0
    %84 = vmatpush1.msra.mxu0 0.0
    %85 = vmatprep.subr.mxu0 0.0
    %86 = vmatpush1.msra.mxu0 0.0
    %87 = vmatprep.subr.mxu0 0.0
    %88 = vmatpush1.msra.mxu0 0.0
    %89 = vmatprep.subr.mxu0 0.0
    %90 = vmatpush1.msra.mxu0 0.0
    %91 = vmatprep.subr.mxu0 0.0
    %92 = vmatpush1.msra.mxu0 0.0
    %93 = vmatprep.subr.mxu0 0.0
    %94 = vmatpush1.msra.mxu0 0.0
    %95 = vmatprep.subr.mxu0 0.0
    %96 = vmatpush1.msra.mxu0 0.0
    %97 = vmatprep.subr.mxu0 0.0
    %98 = vmatpush1.msra.mxu0 0.0
    %99 = vmatprep.subr.mxu0 0.0
    %100 = vmatpush1.msra.mxu0 0.0
    %101 = vmatprep.mubr.f32.mxu0 0.0
    %102 = vmatmul.mubr.f32.gmra.mrb[0].mxu0 %v31
    %v103 = vpop.f32.mrb[0].mxu0
    %v104 = vadd.f32 %v27, %v103
    %v105 = vpop.f32.mrb[0].mxu0
    %106 = vdwg.mxu0
    %v107 = vxor.u32 %v104, 2147483648
    %v108 = vmul.f32 %v107, 1.442695
    %v109 = vpow.pop %v108
    %v110 = vadd.f32 %v109, 1.0
    %v111 = vrcp.pop %v110
    %v112 = vmul.f32 1.0, %v111
    %v113 = vld [vmem:[%s3] sm:$0x7]
    %v114 = vld [vmem:[%s4] sm:$0x7]
    %116 = vset.pattern.permute.xlu0 0
    %117 = vperm.xlu0 %116, %v114
    %v118 = vpop.permute.xlu0 %117
    %vm120 = vcmask 48128
    %v122 = vsel %vm120, %v113, 0
    %vm124 = vcmask 1045504
    %v126 = vsel %vm124, %v112, 0
    %128 = vmatprep.subr.mxu0 0.0
    %129 = vmatpush1.msra.mxu0 %v126
    %130 = vmatprep.subr.mxu0 0.0
    %131 = vmatpush1.msra.mxu0 0.0
    %132 = vmatprep.subr.mxu0 0.0
    %133 = vmatpush1.msra.mxu0 0.0
    %134 = vmatprep.subr.mxu0 0.0
    %135 = vmatpush1.msra.mxu0 0.0
    %136 = vmatprep.subr.mxu0 0.0
    %137 = vmatpush1.msra.mxu0 0.0
    %138 = vmatprep.subr.mxu0 0.0
    %139 = vmatpush1.msra.mxu0 0.0
    %140 = vmatprep.subr.mxu0 0.0
    %141 = vmatpush1.msra.mxu0 0.0
    %142 = vmatprep.subr.mxu0 0.0
    %143 = vmatpush1.msra.mxu0 0.0
    %144 = vmatprep.subr.mxu0 0.0
    %145 = vmatpush1.msra.mxu0 0.0
    %146 = vmatprep.subr.mxu0 0.0
    %147 = vmatpush1.msra.mxu0 0.0
    %148 = vmatprep.subr.mxu0 0.0
    %149 = vmatpush1.msra.mxu0 0.0
    %150 = vmatprep.subr.mxu0 0.0
    %151 = vmatpush1.msra.mxu0 0.0
    %152 = vmatprep.subr.mxu0 0.0
    %153 = vmatpush1.msra.mxu0 0.0
    %154 = vmatprep.subr.mxu0 0.0
    %155 = vmatpush1.msra.mxu0 0.0
    %156 = vmatprep.subr.mxu0 0.0
    %157 = vmatpush1.msra.mxu0 0.0
    %158 = vmatprep.subr.mxu0 0.0
    %159 = vmatpush1.msra.mxu0 0.0
    %160 = vmatprep.subr.mxu0 0.0
    %161 = vmatpush1.msra.mxu0 0.0
    %162 = vmatprep.subr.mxu0 0.0
    %163 = vmatpush1.msra.mxu0 0.0
    %164 = vmatprep.subr.mxu0 0.0
    %165 = vmatpush1.msra.mxu0 0.0
    %166 = vmatprep.subr.mxu0 0.0
    %167 = vmatpush1.msra.mxu0 0.0
    %168 = vmatprep.subr.mxu0 0.0
    %169 = vmatpush1.msra.mxu0 0.0
    %170 = vmatprep.subr.mxu0 0.0
    %171 = vmatpush1.msra.mxu0 0.0
    %172 = vmatprep.subr.mxu0 0.0
    %173 = vmatpush1.msra.mxu0 0.0
    %174 = vmatprep.subr.mxu0 0.0
    %175 = vmatpush1.msra.mxu0 0.0
    %176 = vmatprep.subr.mxu0 0.0
    %177 = vmatpush1.msra.mxu0 0.0
    %178 = vmatprep.subr.mxu0 0.0
    %179 = vmatpush1.msra.mxu0 0.0
    %180 = vmatprep.subr.mxu0 0.0
    %181 = vmatpush1.msra.mxu0 0.0
    %182 = vmatprep.subr.mxu0 0.0
    %183 = vmatpush1.msra.mxu0 0.0
    %184 = vmatprep.subr.mxu0 0.0
    %185 = vmatpush1.msra.mxu0 0.0
    %186 = vmatprep.subr.mxu0 0.0
    %187 = vmatpush1.msra.mxu0 0.0
    %188 = vmatprep.subr.mxu0 0.0
    %189 = vmatpush1.msra.mxu0 0.0
    %190 = vmatprep.subr.mxu0 0.0
    %191 = vmatpush1.msra.mxu0 0.0
    %192 = vmatprep.mubr.f32.mxu0 0.0
    %193 = vmatmul.mubr.f32.gmra.mrb[0].mxu0 %v122
    %v194 = vpop.f32.mrb[0].mxu0
    %v195 = vadd.f32 %v118, %v194
    %v196 = vpop.f32.mrb[0].mxu0
    %197 = vdwg.mxu0
    %198 = vst [vmem:[#allocation2] sm:$0x7] %v195
    // Predicated region
    $region22: #{tpu_custom_call.1} parent=1 // pred_check
      _
    $region23: #{tpu_custom_call.1} parent=1 // pred_check_branch
      %200 = sbr.rel (0) target = $region25
    $region24: #{tpu_custom_call.1} parent=1 // pred_region
      %s202 = ssub.s32 64, 64
      %203 = vsyncadd [#allocation3], %s202
      %s205 = sshll.u32 [#allocation2], 4
      %s206 = int_to_ptr.vmem [resolvable:$true] %s205
      %208 = dma.vmem_to_hbm [thread:$0]  %s206, 64, %s5, [#allocation3]
    $region25: #{tpu_custom_call.1} parent=1 // pred_fallthru
      _
    // Predicated region
    $region26: #{tpu_custom_call.1} parent=1 // pred_check
      _
    $region27: #{tpu_custom_call.1} parent=1 // pred_check_branch
      %210 = sbr.rel (0) target = $region29
    $region28: #{tpu_custom_call.1} parent=1 // pred_region
      %211 = dma.done [#allocation3], 64
    $region29: #{tpu_custom_call.1} parent=1 // pred_fallthru
      _
    %212 = vsyncpa [#allocation3], 1

</llo_original>
